<compile_context>
chip_gen: v7x
topology: tpu7x:2x2x1
jax: 0.10.0
libtpu: 0.0.40
codegen_flags: <defaults>
</compile_context>

<pallas_src>
import math

import jax
import jax.numpy as jnp
from jax.experimental import pallas as pl
from jax.experimental.pallas import tpu as pltpu


def _gegate_kernel(x_ref, w_ref, b_ref, o_ref):
    # y = x * w + b   (w, b are (1, W) rows, broadcast over the sublane axis)
    y = x_ref[...].astype(w_ref.dtype) * w_ref[...] + b_ref[...]
    # CappedReLU: keep y where 0 < y <= 1, else 0.
    #   where(y <= 1, max(y, 0), 0)  ==  where((y > 0) & (y <= 1), y, 0)
    o_ref[...] = jnp.where(y <= 1.0, jnp.maximum(y, 0.0), 0.0).astype(o_ref.dtype)


def _crelu_jnp(y):
    return jnp.where((y > 0) & (y <= 1), y, jnp.zeros_like(y))


def _round_up(x, m):
    return ((x + m - 1) // m) * m


def gegate(x, weights, bias, *, target_width=1024, target_block_bytes=8 << 20):
    """x: [..., H]; weights, bias: [H]. Returns crelu(x * weights + bias)."""
    orig_shape = x.shape
    H = orig_shape[-1]
    N = x.size
    dtype = x.dtype
    itemsize = jnp.dtype(dtype).itemsize

    # bf16 inputs run natively in bf16 (v6e/v7x have bf16 VALU; v5e widens in
    # Mosaic). Everything else computes in f32. bf16 path: ~1e-2 rel rounding.
    compute_dtype = jnp.bfloat16 if dtype == jnp.bfloat16 else jnp.float32
    w_c = weights.astype(compute_dtype)
    b_c = bias.astype(compute_dtype)

    # Lane-dense width: multiple of lcm(H, 128) so stores are unmasked full-lane
    # vst and the tiled weights/bias line up with the flattened activation.
    # Prefer a W that divides N exactly -> no pad / slice / concat at all.
    base = (H * 128) // math.gcd(H, 128)          # lcm(H, 128)
    max_k = max(1, target_width // base)
    if N % base == 0:
        units = N // base
        k = 1
        for cand in range(max_k, 0, -1):
            if units % cand == 0:
                k = cand
                break
        W = base * k
    else:
        W = base * max_k
    q, r = divmod(N, W)        # q full rows of width W, r tail elems (mult. of H)

    flat = x.reshape(-1)       # metadata-only reshape (contiguous)

    out_main_flat = None
    if q > 0:
        rows = q
        # Row tiling: target ~8 MiB blocks; TM a multiple of 8 sublanes.
        tm_bytes = max(8, (target_block_bytes // (W * itemsize)) // 8 * 8)
        TM = min(tm_bytes, _round_up(rows, 8))
        # Ensure >= 2 grid steps when rows allow, so ("parallel",) semantics
        # can shard across both v7x TensorCores.
        while TM > 8 and pl.cdiv(rows, TM) < 2:
            TM = max(8, _round_up(TM // 2, 8))
        grid = pl.cdiv(rows, TM)   # ragged last row-block: masked writes

        x2d = flat[: q * W].reshape(rows, W)   # metadata-only when r == 0
        reps = W // H
        w2d = jnp.tile(w_c, reps).reshape(1, W)
        b2d = jnp.tile(b_c, reps).reshape(1, W)

        out2d = pl.pallas_call(
            _gegate_kernel,
            out_shape=jax.ShapeDtypeStruct((rows, W), dtype),
            grid_spec=pltpu.PrefetchScalarGridSpec(
                num_scalar_prefetch=0,
                grid=(grid,),
                in_specs=[
                    pl.BlockSpec((TM, W), lambda i: (i, 0)),   # activation tile
                    pl.BlockSpec((1, W), lambda i: (0, 0)),    # weights (resident)
                    pl.BlockSpec((1, W), lambda i: (0, 0)),    # bias    (resident)
                ],
                out_specs=pl.BlockSpec((TM, W), lambda i: (i, 0)),
            ),
            compiler_params=pltpu.CompilerParams(
                dimension_semantics=("parallel",),
                vmem_limit_bytes=48 << 20,   # 4 double-buffered ~8 MiB blocks
            ),
            cost_estimate=pl.CostEstimate(
                flops=2 * rows * W,
                transcendentals=0,
                bytes_accessed=2 * rows * W * itemsize,
            ),
        )(x2d, w2d, b2d)
        out_main_flat = out2d.reshape(-1)

    if r == 0:
        return out_main_flat.reshape(orig_shape)

    # Sub-W tail (< W elements, a multiple of H): tiny jnp epilogue.
    tail = flat[q * W:]
    reps_t = r // H
    y_tail = tail.astype(compute_dtype) * jnp.tile(w_c, reps_t) + jnp.tile(b_c, reps_t)
    out_tail = _crelu_jnp(y_tail).astype(dtype)
    if out_main_flat is None:
        return out_tail.reshape(orig_shape)
    # Only reached when no W multiple of lcm(H,128) divides N (rare); costs one
    # extra pass over the output.
    return jnp.concatenate([out_main_flat, out_tail]).reshape(orig_shape)


def gegate_reference(x, weights, bias):
    y = x * weights + bias
    return jnp.where((y > 0) & (y <= 1), y, jnp.zeros_like(y))


if __name__ == "__main__":
    B, S, H = 2, 8, 32  # input_size = 32
    key = jax.random.PRNGKey(0)
    kx, kw, kb = jax.random.split(key, 3)

    # scale so values span negative / (0,1] / >1 regions of CappedReLU.
    # (module.weight_init uses ones/zeros; random params here exercise the
    #  broadcast path while staying deterministic.)
    x = jax.random.normal(kx, (B, S, H), dtype=jnp.float32) * 1.5
    weights = jax.random.normal(kw, (H,), dtype=jnp.float32) * 0.5 + 1.0
    bias = jax.random.normal(kb, (H,), dtype=jnp.float32) * 0.25

    out = gegate(x, weights, bias)
    out = jax.block_until_ready(out)
    ref = gegate_reference(x, weights, bias)
    assert out.shape == x.shape
    assert jnp.allclose(out, ref, atol=1e-6), "mismatch vs reference (main path)"

    # Second shape exercises the ragged / tail path (N not a multiple of 128).
    x2 = jax.random.normal(kx, (1, 34, H), dtype=jnp.float32) * 1.5
    out2 = jax.block_until_ready(gegate(x2, weights, bias))
    ref2 = gegate_reference(x2, weights, bias)
    assert out2.shape == x2.shape
    assert jnp.allclose(out2, ref2, atol=1e-6), "mismatch vs reference (tail path)"

    print("KERNEL_OK")
</pallas_src>

<mosaic_0001>
module attributes {stable_mosaic.version = 11 : i64} {
  func.func @_gegate_kernel(%arg0: i32, %arg1: memref<8x512xf32, #tpu.memory_space<vmem>>, %arg2: memref<1x512xf32, #tpu.memory_space<vmem>>, %arg3: memref<1x512xf32, #tpu.memory_space<vmem>>, %arg4: memref<8x512xf32, #tpu.memory_space<vmem>>) attributes {dimension_semantics = [#tpu.dimension_semantics<parallel>], iteration_bounds = array<i64: 1>, scalar_prefetch = 0 : i64, scratch_operands = 0 : i64, tpu.core_type = #tpu.core_type<tc>, window_params = [{transform_indices = @transform_0, window_bounds = array<i64: 8, 512>}, {pipeline_mode = #tpu.pipeline_mode<synchronous>, transform_indices = @transform_1, window_bounds = array<i64: 1, 512>}, {pipeline_mode = #tpu.pipeline_mode<synchronous>, transform_indices = @transform_2, window_bounds = array<i64: 1, 512>}, {transform_indices = @transform_3, window_bounds = array<i64: 8, 512>}]} {
    %c0 = arith.constant 0 : index
    %c0_0 = arith.constant 0 : index
    %0 = vector.load %arg1[%c0, %c0_0] : memref<8x512xf32, #tpu.memory_space<vmem>>, vector<8x512xf32>
    %c0_1 = arith.constant 0 : index
    %c0_2 = arith.constant 0 : index
    %1 = vector.load %arg2[%c0_1, %c0_2] : memref<1x512xf32, #tpu.memory_space<vmem>>, vector<1x512xf32>
    %2 = vector.broadcast %1 : vector<1x512xf32> to vector<8x512xf32>
    %3 = arith.mulf %0, %2 : vector<8x512xf32>
    %c0_3 = arith.constant 0 : index
    %c0_4 = arith.constant 0 : index
    %4 = vector.load %arg3[%c0_3, %c0_4] : memref<1x512xf32, #tpu.memory_space<vmem>>, vector<1x512xf32>
    %5 = vector.broadcast %4 : vector<1x512xf32> to vector<8x512xf32>
    %6 = arith.addf %3, %5 : vector<8x512xf32>
    %cst = arith.constant 1.000000e+00 : f32
    %7 = vector.broadcast %cst : f32 to vector<8x512xf32>
    %8 = arith.cmpf ole, %6, %7 : vector<8x512xf32>
    %cst_5 = arith.constant 0.000000e+00 : f32
    %9 = vector.broadcast %cst_5 : f32 to vector<8x512xf32>
    %10 = arith.maximumf %6, %9 : vector<8x512xf32>
    %cst_6 = arith.constant 0.000000e+00 : f32
    %11 = vector.broadcast %cst_6 : f32 to vector<8x512xf32>
    %12 = arith.select %8, %10, %11 : vector<8x512xi1>, vector<8x512xf32>
    %c0_7 = arith.constant 0 : index
    %c0_8 = arith.constant 0 : index
    %13 = vector.load %arg4[%c0_7, %c0_8] : memref<8x512xf32, #tpu.memory_space<vmem>>, vector<8x512xf32>
    tpu.vector_store %arg4[%c0_7, %c0_8], %12 {strides = array<i32>} : memref<8x512xf32, #tpu.memory_space<vmem>>, vector<8x512xf32>,
    return
  }
  func.func @transform_0(%arg0: i32) -> (i32, i32) {
    %c0_i32 = arith.constant 0 : i32
    %c0_i32_0 = arith.constant 0 : i32
    return %arg0, %c0_i32 : i32, i32
  }
  func.func @transform_1(%arg0: i32) -> (i32, i32) {
    %c0_i32 = arith.constant 0 : i32
    %c0_i32_0 = arith.constant 0 : i32
    %c0_i32_1 = arith.constant 0 : i32
    return %c0_i32, %c0_i32_0 : i32, i32
  }
  func.func @transform_2(%arg0: i32) -> (i32, i32) {
    %c0_i32 = arith.constant 0 : i32
    %c0_i32_0 = arith.constant 0 : i32
    %c0_i32_1 = arith.constant 0 : i32
    return %c0_i32, %c0_i32_0 : i32, i32
  }
  func.func @transform_3(%arg0: i32) -> (i32, i32) {
    %c0_i32 = arith.constant 0 : i32
    %c0_i32_0 = arith.constant 0 : i32
    return %arg0, %c0_i32 : i32, i32
  }
}

</mosaic_0001>

<llo_original>
// kernel: tpu_custom_call.1
$region0: #{tpu_custom_call.1}
  #allocation0 [shape = 'u32[]', space=smem, size = 0x4, offset = 0x4, fixed_abs, tag = 'smem constant byte address 0x4 - core index']
  #allocation1 [shape = 'u32[144,128]{1,0:T(1,128)}', space=vmem, size = 0x12000, scoped, tag = 'internal scratch']
  %s0 = inlined_call_operand.hbm [shape: f32[1,512], index: 0, kind: input, shape index: {}]
  %s1 = inlined_call_operand.hbm [shape: f32[1,512], index: 1, kind: input, shape index: {}]
  %s2 = inlined_call_operand.vmem [shape: f32[1,512], index: 2, kind: input, shape index: {}]
  %s3 = inlined_call_operand.hbm [shape: f32[1,512], index: 3, kind: output, shape index: {}]
  %s4 = sld [smem:[#allocation0]]
  $region30: #{tpu_custom_call.1} parent=0
    _
  %s6 = ssub.s32 1, %s4
  %s7 = scalar_select 0, %s6, %s4
  $region1: #{tpu_custom_call.1} parent=0
    #allocation2 [shape = 'u8[16384]{0}', space=vmem, size = 0x4000, scoped, tag = 'input window, operand 0, single buffered']
    #allocation3 [shape = 's32[1]{0}', space=sflag, size = 0x4, scoped, tag = 'scoped memory for tpu_custom_call.1']
    #allocation4 [shape = 's32[1]{0}', space=sflag, size = 0x4, scoped, tag = 'scoped memory for tpu_custom_call.1']
    #allocation5 [shape = 'u8[2048]{0}', space=vmem, size = 0x800, scoped, tag = 'input window, operand 1, single buffered']
    #allocation6 [shape = 's32[1]{0}', space=sflag, size = 0x4, scoped, tag = 'scoped memory for tpu_custom_call.1']
    #allocation7 [shape = 'u8[16384]{0}', space=vmem, size = 0x4000, scoped, tag = 'output window, operand 0, single buffered']
    %8 = vsyncpa [#allocation3], 0
    %9 = vsyncpa [#allocation6], 0
    %10 = vsyncpa [#allocation4], 0
    // Predicated region
    $region2: #{tpu_custom_call.1} parent=1 // pred_check
      _
    $region3: #{tpu_custom_call.1} parent=1 // pred_check_branch
      %12 = sbr.rel (0) target = $region5
    $region4: #{tpu_custom_call.1} parent=1 // pred_region
      %s14 = ssub.s32 512, 64
      %15 = vsyncadd [#allocation3], %s14
      %s16 = sshll.u32 [#allocation2], 4
      %s17 = int_to_ptr.vmem [resolvable:$true] %s16
      %22 = dma.hbm_to_vmem [thread:$0]  %s0, 64, %s17, [#allocation3], 64, 64, 4
    $region5: #{tpu_custom_call.1} parent=1 // pred_fallthru
      _
    // Predicated region
    $region6: #{tpu_custom_call.1} parent=1 // pred_check
      _
    $region7: #{tpu_custom_call.1} parent=1 // pred_check_branch
      %24 = sbr.rel (0) target = $region9
    $region8: #{tpu_custom_call.1} parent=1 // pred_region
      %s26 = ssub.s32 64, 64
      %27 = vsyncadd [#allocation6], %s26
      %s29 = sshll.u32 [#allocation5], 4
      %s30 = int_to_ptr.vmem [resolvable:$true] %s29
      %32 = dma.hbm_to_vmem [thread:$0]  %s1, 64, %s30, [#allocation6]
    $region9: #{tpu_custom_call.1} parent=1 // pred_fallthru
      _
    // Predicated region
    $region10: #{tpu_custom_call.1} parent=1 // pred_check
      _
    $region11: #{tpu_custom_call.1} parent=1 // pred_check_branch
      %34 = sbr.rel (0) target = $region13
    $region12: #{tpu_custom_call.1} parent=1 // pred_region
      _
    $region13: #{tpu_custom_call.1} parent=1 // pred_fallthru
      _
    // Predicated region
    $region14: #{tpu_custom_call.1} parent=1 // pred_check
      _
    $region15: #{tpu_custom_call.1} parent=1 // pred_check_branch
      %36 = sbr.rel (0) target = $region17
    $region16: #{tpu_custom_call.1} parent=1 // pred_region
      %37 = dma.done [#allocation3], 512
    $region17: #{tpu_custom_call.1} parent=1 // pred_fallthru
      _
    // Predicated region
    $region18: #{tpu_custom_call.1} parent=1 // pred_check
      _
    $region19: #{tpu_custom_call.1} parent=1 // pred_check_branch
      %39 = sbr.rel (0) target = $region21
    $region20: #{tpu_custom_call.1} parent=1 // pred_region
      %40 = dma.done [#allocation6], 64
    $region21: #{tpu_custom_call.1} parent=1 // pred_fallthru
      _
    %v41 = vld [vmem:[#allocation2] sm:$0xf]
    %v42 = vld [vmem:[#allocation2 + $0x4] sm:$0xf]
    %v43 = vld [vmem:[#allocation2 + $0x8] sm:$0xf]
    %v44 = vld [vmem:[#allocation2 + $0xc] sm:$0xf]
    %v45 = vld [vmem:[#allocation2 + $0x10] sm:$0xf]
    %v46 = vld [vmem:[#allocation2 + $0x14] sm:$0xf]
    %v47 = vld [vmem:[#allocation2 + $0x18] sm:$0xf]
    %v48 = vld [vmem:[#allocation2 + $0x1c] sm:$0xf]
    %v49 = vld [vmem:[#allocation5] sm:$0xf]
    %v51 = vlaneseq
    %v52 = vshrl.u32 %v51, 7
    %v53 = vsub.s32 0, %v52
    %v54 = vrot.slane %v49, %v53
    %v55 = vlaneseq
    %v56 = vshrl.u32 %v55, 7
    %v57 = vsub.s32 1, %v56
    %v58 = vrot.slane %v49, %v57
    %v59 = vlaneseq
    %v60 = vshrl.u32 %v59, 7
    %v61 = vsub.s32 2, %v60
    %v62 = vrot.slane %v49, %v61
    %v63 = vlaneseq
    %v64 = vshrl.u32 %v63, 7
    %v65 = vsub.s32 3, %v64
    %v66 = vrot.slane %v49, %v65
    %v67 = vcombine.low %v54, %v58
    %v68 = vcombine.high %v54, %v58
    %v69 = vcombine.low %v62, %v66
    %v70 = vcombine.high %v62, %v66
    %v72 = vunpack.c.l.s4 1966171168
    %v73 = vunpack.c.0.s8 %v72
    %v74 = vlaneseq
    %v75 = vshrl.u32 %v74, 7
    %v76 = vsub.s32 %v73, %v75
    %v77 = vrot.slane %v67, %v76
    %v79 = vunpack.c.l.s4 1966171168
    %v80 = vunpack.c.0.s8 %v79
    %v81 = vlaneseq
    %v82 = vshrl.u32 %v81, 7
    %v83 = vsub.s32 %v80, %v82
    %v84 = vrot.slane %v68, %v83
    %v86 = vunpack.c.l.s4 1966171168
    %v87 = vunpack.c.0.s8 %v86
    %v88 = vlaneseq
    %v89 = vshrl.u32 %v88, 7
    %v90 = vsub.s32 %v87, %v89
    %v91 = vrot.slane %v69, %v90
    %v93 = vunpack.c.l.s4 1966171168
    %v94 = vunpack.c.0.s8 %v93
    %v95 = vlaneseq
    %v96 = vshrl.u32 %v95, 7
    %v97 = vsub.s32 %v94, %v96
    %v98 = vrot.slane %v70, %v97
    %v99 = vcombine.low %v77, %v91
    %v100 = vcombine.high %v77, %v91
    %v101 = vcombine.low %v84, %v98
    %v102 = vcombine.high %v84, %v98
    %v104 = vunpack.c.l.s4 1966171168
    %v105 = vunpack.c.0.s8 %v104
    %v106 = vlaneseq
    %v107 = vshrl.u32 %v106, 7
    %v108 = vsub.s32 %v105, %v107
    %v109 = vrot.slane %v99, %v108
    %v111 = vunpack.c.l.s4 1966171168
    %v112 = vunpack.c.0.s8 %v111
    %v113 = vlaneseq
    %v114 = vshrl.u32 %v113, 7
    %v115 = vsub.s32 %v112, %v114
    %v116 = vrot.slane %v101, %v115
    %v118 = vunpack.c.l.s4 1966171168
    %v119 = vunpack.c.0.s8 %v118
    %v120 = vlaneseq
    %v121 = vshrl.u32 %v120, 7
    %v122 = vsub.s32 %v119, %v121
    %v123 = vrot.slane %v100, %v122
    %v125 = vunpack.c.l.s4 1966171168
    %v126 = vunpack.c.0.s8 %v125
    %v127 = vlaneseq
    %v128 = vshrl.u32 %v127, 7
    %v129 = vsub.s32 %v126, %v128
    %v130 = vrot.slane %v102, %v129
    %v131 = vcombine.high %v109, %v109
    %v132 = vcombine.high %v116, %v116
    %v133 = vcombine.high %v123, %v123
    %v134 = vcombine.high %v130, %v130
    %v143 = vmul.f32 %v41, %v109
    %v144 = vmul.f32 %v42, %v123
    %v145 = vmul.f32 %v43, %v131
    %v146 = vmul.f32 %v44, %v133
    %v147 = vmul.f32 %v45, %v116
    %v148 = vmul.f32 %v46, %v130
    %v149 = vmul.f32 %v47, %v132
    %v150 = vmul.f32 %v48, %v134
    %v151 = vld [vmem:[%s2] sm:$0xf]
    %v153 = vlaneseq
    %v154 = vshrl.u32 %v153, 7
    %v155 = vsub.s32 0, %v154
    %v156 = vrot.slane %v151, %v155
    %v157 = vlaneseq
    %v158 = vshrl.u32 %v157, 7
    %v159 = vsub.s32 1, %v158
    %v160 = vrot.slane %v151, %v159
    %v161 = vlaneseq
    %v162 = vshrl.u32 %v161, 7
    %v163 = vsub.s32 2, %v162
    %v164 = vrot.slane %v151, %v163
    %v165 = vlaneseq
    %v166 = vshrl.u32 %v165, 7
    %v167 = vsub.s32 3, %v166
    %v168 = vrot.slane %v151, %v167
    %v169 = vcombine.low %v156, %v160
    %v170 = vcombine.high %v156, %v160
    %v171 = vcombine.low %v164, %v168
    %v172 = vcombine.high %v164, %v168
    %v174 = vunpack.c.l.s4 1966171168
    %v175 = vunpack.c.0.s8 %v174
    %v176 = vlaneseq
    %v177 = vshrl.u32 %v176, 7
    %v178 = vsub.s32 %v175, %v177
    %v179 = vrot.slane %v169, %v178
    %v181 = vunpack.c.l.s4 1966171168
    %v182 = vunpack.c.0.s8 %v181
    %v183 = vlaneseq
    %v184 = vshrl.u32 %v183, 7
    %v185 = vsub.s32 %v182, %v184
    %v186 = vrot.slane %v170, %v185
    %v188 = vunpack.c.l.s4 1966171168
    %v189 = vunpack.c.0.s8 %v188
    %v190 = vlaneseq
    %v191 = vshrl.u32 %v190, 7
    %v192 = vsub.s32 %v189, %v191
    %v193 = vrot.slane %v171, %v192
    %v195 = vunpack.c.l.s4 1966171168
    %v196 = vunpack.c.0.s8 %v195
    %v197 = vlaneseq
    %v198 = vshrl.u32 %v197, 7
    %v199 = vsub.s32 %v196, %v198
    %v200 = vrot.slane %v172, %v199
    %v201 = vcombine.low %v179, %v193
    %v202 = vcombine.high %v179, %v193
    %v203 = vcombine.low %v186, %v200
    %v204 = vcombine.high %v186, %v200
    %v206 = vunpack.c.l.s4 1966171168
    %v207 = vunpack.c.0.s8 %v206
    %v208 = vlaneseq
    %v209 = vshrl.u32 %v208, 7
    %v210 = vsub.s32 %v207, %v209
    %v211 = vrot.slane %v201, %v210
    %v213 = vunpack.c.l.s4 1966171168
    %v214 = vunpack.c.0.s8 %v213
    %v215 = vlaneseq
    %v216 = vshrl.u32 %v215, 7
    %v217 = vsub.s32 %v214, %v216
    %v218 = vrot.slane %v203, %v217
    %v220 = vunpack.c.l.s4 1966171168
    %v221 = vunpack.c.0.s8 %v220
    %v222 = vlaneseq
    %v223 = vshrl.u32 %v222, 7
    %v224 = vsub.s32 %v221, %v223
    %v225 = vrot.slane %v202, %v224
    %v227 = vunpack.c.l.s4 1966171168
    %v228 = vunpack.c.0.s8 %v227
    %v229 = vlaneseq
    %v230 = vshrl.u32 %v229, 7
    %v231 = vsub.s32 %v228, %v230
    %v232 = vrot.slane %v204, %v231
    %v233 = vcombine.high %v211, %v211
    %v234 = vcombine.high %v218, %v218
    %v235 = vcombine.high %v225, %v225
    %v236 = vcombine.high %v232, %v232
    %v245 = vadd.f32 %v143, %v211
    %v246 = vadd.f32 %v144, %v225
    %v247 = vadd.f32 %v145, %v233
    %v248 = vadd.f32 %v146, %v235
    %v249 = vadd.f32 %v147, %v218
    %v250 = vadd.f32 %v148, %v232
    %v251 = vadd.f32 %v149, %v234
    %v252 = vadd.f32 %v150, %v236
    %vm253 = vcmp.le.f32.partialorder %v245, 1.0
    %vm254 = vcmp.le.f32.partialorder %v246, 1.0
    %vm255 = vcmp.le.f32.partialorder %v247, 1.0
    %vm256 = vcmp.le.f32.partialorder %v248, 1.0
    %vm257 = vcmp.le.f32.partialorder %v249, 1.0
    %vm258 = vcmp.le.f32.partialorder %v250, 1.0
    %vm259 = vcmp.le.f32.partialorder %v251, 1.0
    %vm260 = vcmp.le.f32.partialorder %v252, 1.0
    %v261 = vmax.f32 %v245, 0.0
    %v262 = vmax.f32 %v246, 0.0
    %v263 = vmax.f32 %v247, 0.0
    %v264 = vmax.f32 %v248, 0.0
    %v265 = vmax.f32 %v249, 0.0
    %v266 = vmax.f32 %v250, 0.0
    %v267 = vmax.f32 %v251, 0.0
    %v268 = vmax.f32 %v252, 0.0
    %v269 = vsel %vm253, %v261, 0.0
    %v270 = vsel %vm254, %v262, 0.0
    %v271 = vsel %vm255, %v263, 0.0
    %v272 = vsel %vm256, %v264, 0.0
    %v273 = vsel %vm257, %v265, 0.0
    %v274 = vsel %vm258, %v266, 0.0
    %v275 = vsel %vm259, %v267, 0.0
    %v276 = vsel %vm260, %v268, 0.0
    %v277 = vlaneseq
    %vm278 = vcmp.ge.s32.totalorder %v277, 0
    %vm279 = vcmp.lt.s32.totalorder %v277, 512
    %vm280 = vmand %vm278, %vm279
    %281 = vst.msk [vmem:[#allocation7] sm:$0xf] %vm280, %v269
    %282 = vst.msk [vmem:[#allocation7 + $0x4] sm:$0xf] %vm280, %v270
    %283 = vst.msk [vmem:[#allocation7 + $0x8] sm:$0xf] %vm280, %v271
    %284 = vst.msk [vmem:[#allocation7 + $0xc] sm:$0xf] %vm280, %v272
    %285 = vst.msk [vmem:[#allocation7 + $0x10] sm:$0xf] %vm280, %v273
    %286 = vst.msk [vmem:[#allocation7 + $0x14] sm:$0xf] %vm280, %v274
    %287 = vst.msk [vmem:[#allocation7 + $0x18] sm:$0xf] %vm280, %v275
    %288 = vst.msk [vmem:[#allocation7 + $0x1c] sm:$0xf] %vm280, %v276
    // Predicated region
    $region22: #{tpu_custom_call.1} parent=1 // pred_check
      _
    $region23: #{tpu_custom_call.1} parent=1 // pred_check_branch
      %290 = sbr.rel (0) target = $region25
    $region24: #{tpu_custom_call.1} parent=1 // pred_region
      %s292 = ssub.s32 512, 64
      %293 = vsyncadd [#allocation4], %s292
      %s294 = sshll.u32 [#allocation7], 4
      %s295 = int_to_ptr.vmem [resolvable:$true] %s294
      %300 = dma.vmem_to_hbm [thread:$0]  %s295, 64, %s3, [#allocation4], 64, 64, 4
    $region25: #{tpu_custom_call.1} parent=1 // pred_fallthru
      _
    // Predicated region
    $region26: #{tpu_custom_call.1} parent=1 // pred_check
      _
    $region27: #{tpu_custom_call.1} parent=1 // pred_check_branch
      %302 = sbr.rel (0) target = $region29
    $region28: #{tpu_custom_call.1} parent=1 // pred_region
      %303 = dma.done [#allocation4], 512
    $region29: #{tpu_custom_call.1} parent=1 // pred_fallthru
      _
    %304 = vsyncpa [#allocation3], 1
    %305 = vsyncpa [#allocation6], 1
    %306 = vsyncpa [#allocation4], 1

</llo_original>
